<compile_context>
chip_gen: v7x
topology: tpu7x:2x2x1
jax: 0.10.0
libtpu: 0.0.40
codegen_flags: <defaults>
</compile_context>

<pallas_src>
import functools

import jax
import jax.numpy as jnp
from jax.experimental import pallas as pl
from jax.experimental.pallas import tpu as pltpu


def _scale_kernel(scale_ref, x_ref, o_ref):
    # scale_ref: (1,) float32 in SMEM; x_ref / o_ref: (rows_per_block, cols) VMEM.
    o_ref[...] = (x_ref[...] * scale_ref[0]).astype(o_ref.dtype)


def _round_up(v, m):
    return ((v + m - 1) // m) * m


def _cdiv(a, b):
    return (a + b - 1) // b


@functools.lru_cache(maxsize=1)
def _default_target_block_bytes():
    """Per-generation block-size target (bytes), queried once."""
    try:
        vmem_cap = int(pltpu.get_tpu_info().vmem_capacity_bytes)
    except Exception:  # interpret mode / unknown backend -> conservative
        vmem_cap = 64 << 20
    if vmem_cap <= (64 << 20):
        # v7x-class: 3.2 TB/s HBM but only 64 MiB VMEM per TensorCore.
        # 6 MiB blocks amortize per-step overhead; 2x(in+out) footprint ~24 MiB.
        return 6 << 20
    # v5e / v6e (128 MiB VMEM): 4 MiB blocks reach ~86% of HBM roofline;
    # the ~16 MiB footprint needs the raised scoped-VMEM limit on v5e.
    return 4 << 20


def scale_forward(x, scale, *, target_block_bytes=None,
                  min_kernel_bytes=256 * 1024, donate_input=False):
    """Elementwise `x * scale`; `scale` is a (1,)/0-d float32 learnable scalar."""
    orig_shape = x.shape
    orig_dtype = x.dtype
    itemsize = jnp.dtype(orig_dtype).itemsize
    total = x.size

    scale = jnp.asarray(scale, dtype=jnp.float32).reshape(-1)  # tolerate 0-d / (1,)

    # Tiny / degenerate tensors: pallas_call launch + pipeline prologue (~us)
    # dominates below a few hundred KiB; a fused XLA multiply is strictly
    # faster there. Also covers 0-d and 0-size inputs.
    if x.ndim == 0 or total == 0 or total * itemsize < min_kernel_bytes:
        return (x * scale[0]).astype(orig_dtype)

    if target_block_bytes is None:
        target_block_bytes = _default_target_block_bytes()

    lane = 128
    # dtype-aware sublane packing: 8 rows (f32), 16 (bf16/fp16), 32 (int8/fp8)
    sublane = max(8, 32 // itemsize)

    # ---- choose a lane-dense 2D view without any extra HBM copies ----------
    last = orig_shape[-1]
    if last % lane == 0 and last <= 16384:
        cols = last                                  # (N*C*H, W)
    elif (len(orig_shape) >= 2 and (last * orig_shape[-2]) % lane == 0
          and last * orig_shape[-2] <= 16384):
        cols = last * orig_shape[-2]                 # (N*C, H*W)
    elif total % lane == 0:
        cols = lane                                  # (total / 128, 128)
    else:
        # Ragged trailing dim: keep it at full extent (block last dim equals
        # the array last dim), accepting masked stores on the <128 lane tail.
        # Replaces the old pad + slice-back path which added two extra full
        # HBM passes (~3x traffic) on ragged inputs.
        cols = last
        if cols * sublane * itemsize > (16 << 20):
            # Degenerate, extremely wide ragged rows: plain XLA multiply.
            return (x * scale[0]).astype(orig_dtype)

    rows = total // cols
    x2d = x.reshape(rows, cols)

    # ---- block sizing: ~target_block_bytes, multiple of the dtype sublane --
    rows_per_block = max(
        sublane, (target_block_bytes // (cols * itemsize)) // sublane * sublane)
    # Keep the grid length >= 2 where possible so both TensorCores on v7x get
    # work ("parallel" shards the grid axis across cores).
    half_rows = max(sublane, _round_up(_cdiv(rows, 2), sublane))
    rows_per_block = min(rows_per_block, half_rows, _round_up(rows, sublane))
    if rows_per_block >= rows:
        rows_per_block = rows        # single full-extent block (always legal)
    grid = (_cdiv(rows, rows_per_block),)            # ragged last block OK

    block_bytes = rows_per_block * cols * itemsize
    # Double-buffered in + out footprint is ~4x block_bytes; leave headroom.
    # 32 MiB is >= the default scoped limit on every generation and well under
    # v7x's 64 MiB physical VMEM.
    vmem_limit_bytes = max(32 << 20, 4 * block_bytes + (4 << 20))

    cost = pl.CostEstimate(flops=total, transcendentals=0,
                           bytes_accessed=2 * total * itemsize + 4)

    extra_kwargs = {}
    if donate_input:
        # Inference-only: write the result in place into x's buffer.  Do NOT
        # enable when x must survive (e.g. needed for d_scale in backward).
        extra_kwargs["input_output_aliases"] = {1: 0}

    out2d = pl.pallas_call(
        _scale_kernel,
        out_shape=jax.ShapeDtypeStruct((rows, cols), orig_dtype),
        grid_spec=pltpu.PrefetchScalarGridSpec(
            num_scalar_prefetch=0,
            grid=grid,
            in_specs=[
                pl.BlockSpec(memory_space=pltpu.SMEM),                   # scale
                pl.BlockSpec((rows_per_block, cols), lambda i: (i, 0)),  # x
            ],
            out_specs=pl.BlockSpec((rows_per_block, cols), lambda i: (i, 0)),
        ),
        compiler_params=pltpu.CompilerParams(
            # "parallel" lets v7x shard this mem-bound stream across both TCs.
            dimension_semantics=("parallel",),
            vmem_limit_bytes=vmem_limit_bytes,
        ),
        cost_estimate=cost,
        **extra_kwargs,
    )(scale, x2d)

    return out2d.reshape(orig_shape)


if __name__ == "__main__":
    key = jax.random.PRNGKey(0)
    # NCHW input, consistent with typical conv-feature usage of Scale.
    x = jax.random.normal(key, (2, 4, 16, 16), dtype=jnp.float32)

    # Deterministic parameter init, matching nn.Parameter(torch.FloatTensor([2.0]))
    scale = jnp.array([2.0], dtype=jnp.float32)

    # min_kernel_bytes=0 so this small smoke test exercises the Pallas kernel
    # (production default routes <256 KiB tensors to the fused XLA multiply).
    out = scale_forward(x, scale, min_kernel_bytes=0)
    out = jax.block_until_ready(out)

    # Correctness check against plain JAX reference.
    ref = x * scale[0]
    assert out.shape == x.shape and out.dtype == x.dtype
    assert jnp.allclose(out, ref, atol=1e-6, rtol=1e-6)

    print("KERNEL_OK")
</pallas_src>

<mosaic_0001>
module attributes {stable_mosaic.version = 11 : i64} {
  func.func @_scale_kernel(%arg0: i32, %arg1: memref<1xf32, #tpu.memory_space<smem>>, %arg2: memref<8x256xf32, #tpu.memory_space<vmem>>, %arg3: memref<8x256xf32, #tpu.memory_space<vmem>>) attributes {dimension_semantics = [#tpu.dimension_semantics<parallel>], iteration_bounds = array<i64: 1>, scalar_prefetch = 0 : i64, scratch_operands = 0 : i64, tpu.core_type = #tpu.core_type<tc>, window_params = [{transform_indices = @transform_0, window_bounds = array<i64: 1>}, {transform_indices = @transform_1, window_bounds = array<i64: 8, 256>}, {transform_indices = @transform_2, window_bounds = array<i64: 8, 256>}]} {
    %c0 = arith.constant 0 : index
    %c0_0 = arith.constant 0 : index
    %0 = vector.load %arg2[%c0, %c0_0] : memref<8x256xf32, #tpu.memory_space<vmem>>, vector<8x256xf32>
    %c0_1 = arith.constant 0 : index
    %1 = memref.load %arg1[%c0_1] : memref<1xf32, #tpu.memory_space<smem>>
    %2 = vector.broadcast %1 : f32 to vector<8x256xf32>
    %3 = arith.mulf %0, %2 : vector<8x256xf32>
    %c0_2 = arith.constant 0 : index
    %c0_3 = arith.constant 0 : index
    %4 = vector.load %arg3[%c0_2, %c0_3] : memref<8x256xf32, #tpu.memory_space<vmem>>, vector<8x256xf32>
    tpu.vector_store %arg3[%c0_2, %c0_3], %3 {strides = array<i32>} : memref<8x256xf32, #tpu.memory_space<vmem>>, vector<8x256xf32>,
    return
  }
  func.func @transform_0(%arg0: i32) -> i32 {
    %c0_i32 = arith.constant 0 : i32
    %c0_i32_0 = arith.constant 0 : i32
    return %c0_i32 : i32
  }
  func.func @transform_1(%arg0: i32) -> (i32, i32) {
    %c0_i32 = arith.constant 0 : i32
    %c0_i32_0 = arith.constant 0 : i32
    return %arg0, %c0_i32 : i32, i32
  }
  func.func @transform_2(%arg0: i32) -> (i32, i32) {
    %c0_i32 = arith.constant 0 : i32
    %c0_i32_0 = arith.constant 0 : i32
    return %arg0, %c0_i32 : i32, i32
  }
}

</mosaic_0001>

<llo_original>
// kernel: tpu_custom_call.1
$region0: #{tpu_custom_call.1}
  #allocation0 [shape = 'u32[]', space=smem, size = 0x4, offset = 0x4, fixed_abs, tag = 'smem constant byte address 0x4 - core index']
  #allocation1 [shape = 'u32[144,128]{1,0:T(1,128)}', space=vmem, size = 0x12000, scoped, tag = 'internal scratch']
  #allocation2 [shape = 'f32[1]{0:T(128)S(6)}', space=smem, size = 0x200, scoped, tag = 'scoped memory for tpu_custom_call.1']
  %s0 = inlined_call_operand.<no memory space> [shape: f32[1], index: 0, kind: input, shape index: {}]
  %s1 = inlined_call_operand.hbm [shape: f32[8,256], index: 1, kind: input, shape index: {}]
  %s2 = inlined_call_operand.hbm [shape: f32[8,256], index: 2, kind: output, shape index: {}]
  %s3 = sld [smem:[#allocation0]]
  $region22: #{tpu_custom_call.1} parent=0
    _
  %s5 = ssub.s32 1, %s3
  %s6 = scalar_select 0, %s5, %s3
  %7 = sst [smem:[#allocation2]] %s0
  $region1: #{tpu_custom_call.1} parent=0
    #allocation3 [shape = 'u8[8192]{0}', space=vmem, size = 0x2000, scoped, tag = 'input window, operand 1, single buffered']
    #allocation4 [shape = 's32[1]{0}', space=sflag, size = 0x4, scoped, tag = 'scoped memory for tpu_custom_call.1']
    #allocation5 [shape = 's32[1]{0}', space=sflag, size = 0x4, scoped, tag = 'scoped memory for tpu_custom_call.1']
    #allocation6 [shape = 'u8[8192]{0}', space=vmem, size = 0x2000, scoped, tag = 'output window, operand 0, single buffered']
    %8 = vsyncpa [#allocation4], 0
    %9 = vsyncpa [#allocation5], 0
    // Predicated region
    $region2: #{tpu_custom_call.1} parent=1 // pred_check
      _
    $region3: #{tpu_custom_call.1} parent=1 // pred_check_branch
      %11 = sbr.rel (0) target = $region5
    $region4: #{tpu_custom_call.1} parent=1 // pred_region
      _
    $region5: #{tpu_custom_call.1} parent=1 // pred_fallthru
      _
    // Predicated region
    $region6: #{tpu_custom_call.1} parent=1 // pred_check
      _
    $region7: #{tpu_custom_call.1} parent=1 // pred_check_branch
      %13 = sbr.rel (0) target = $region9
    $region8: #{tpu_custom_call.1} parent=1 // pred_region
      %s15 = ssub.s32 256, 256
      %16 = vsyncadd [#allocation4], %s15
      %s18 = sshll.u32 [#allocation3], 4
      %s19 = int_to_ptr.vmem [resolvable:$true] %s18
      %21 = dma.hbm_to_vmem [thread:$0]  %s1, 256, %s19, [#allocation4]
    $region9: #{tpu_custom_call.1} parent=1 // pred_fallthru
      _
    // Predicated region
    $region10: #{tpu_custom_call.1} parent=1 // pred_check
      _
    $region11: #{tpu_custom_call.1} parent=1 // pred_check_branch
      %23 = sbr.rel (0) target = $region13
    $region12: #{tpu_custom_call.1} parent=1 // pred_region
      %24 = dma.done [#allocation4], 256
    $region13: #{tpu_custom_call.1} parent=1 // pred_fallthru
      _
    %v25 = vld [vmem:[#allocation3] sm:$0xff]
    %v26 = vld [vmem:[#allocation3 + $0x8] sm:$0xff]
    %s27 = sld [smem:[#allocation2]]
    %v28 = vstv %s27
    %v29 = vmul.f32 %v25, %v28
    %v30 = vmul.f32 %v26, %v28
    %31 = vst [vmem:[#allocation6] sm:$0xff] %v29
    %32 = vst [vmem:[#allocation6 + $0x8] sm:$0xff] %v30
    // Predicated region
    $region14: #{tpu_custom_call.1} parent=1 // pred_check
      _
    $region15: #{tpu_custom_call.1} parent=1 // pred_check_branch
      %34 = sbr.rel (0) target = $region17
    $region16: #{tpu_custom_call.1} parent=1 // pred_region
      %s36 = ssub.s32 256, 256
      %37 = vsyncadd [#allocation5], %s36
      %s39 = sshll.u32 [#allocation6], 4
      %s40 = int_to_ptr.vmem [resolvable:$true] %s39
      %42 = dma.vmem_to_hbm [thread:$0]  %s40, 256, %s2, [#allocation5]
    $region17: #{tpu_custom_call.1} parent=1 // pred_fallthru
      _
    // Predicated region
    $region18: #{tpu_custom_call.1} parent=1 // pred_check
      _
    $region19: #{tpu_custom_call.1} parent=1 // pred_check_branch
      %44 = sbr.rel (0) target = $region21
    $region20: #{tpu_custom_call.1} parent=1 // pred_region
      %45 = dma.done [#allocation5], 256
    $region21: #{tpu_custom_call.1} parent=1 // pred_fallthru
      _
    %46 = vsyncpa [#allocation4], 1
    %47 = vsyncpa [#allocation5], 1

</llo_original>
